<compile_context>
chip_gen: v7x
topology: tpu7x:2x2x1
jax: 0.10.0
libtpu: 0.0.40
codegen_flags: <defaults>
</compile_context>

<pallas_src>
import numpy as np
import jax
import jax.numpy as jnp
from jax.experimental import pallas as pl
from jax.experimental.pallas import tpu as pltpu


# ----------------------------------------------------------------------------
# Pallas kernel: separable-moment RocStar loss
# ----------------------------------------------------------------------------
def _rocstar_kernel(gamma_ref, yp_ref, yt_ref, hp_ref, ht_ref, loss_ref, probs_ref):
    gamma = gamma_ref[0, 0]

    # Current batch, lane-dense (1, B).
    logits = yp_ref[...]
    p = pl.reciprocal(1.0 + jnp.exp(-logits))     # apply_sigmoid=True (exact recip)
    probs_ref[...] = p                            # reused by history rollover
    yt = yt_ref[...]
    pos_m = (yt > 0.0).astype(jnp.float32)        # batch positives mask
    neg_m = (yt < 1.0).astype(jnp.float32)        # batch negatives mask

    # History sample, lane-dense (1, S).
    hp = hp_ref[...]
    ht = ht_ref[...]
    hpos_m = (ht > 0.0).astype(jnp.float32)       # history positives mask
    hneg_m = (ht < 1.0).astype(jnp.float32)       # history negatives mask

    p2 = p * p
    hp2 = hp * hp

    # Masked 1-D moments of the batch probabilities.
    n_pos = jnp.sum(pos_m)
    s_pos1 = jnp.sum(pos_m * p)
    s_pos2 = jnp.sum(pos_m * p2)
    n_neg = jnp.sum(neg_m)
    s_neg1 = jnp.sum(neg_m * p)
    s_neg2 = jnp.sum(neg_m * p2)

    # Masked 1-D moments of the history probabilities.
    n_hpos = jnp.sum(hpos_m)
    s_hpos1 = jnp.sum(hpos_m * hp)
    s_hpos2 = jnp.sum(hpos_m * hp2)
    n_hneg = jnp.sum(hneg_m)
    s_hneg1 = jnp.sum(hneg_m * hp)
    s_hneg2 = jnp.sum(hneg_m * hp2)

    g2 = gamma * gamma

    # loss_positive: mean over (pos_i, hist_neg_j) of (h_j + gamma - p_i)^2
    #   sum_ij = Npos*Σh² + Npos*Nhneg*g² + Nhneg*Σp² + 2g*Npos*Σh
    #            - 2*Σp*Σh - 2g*Nhneg*Σp        (p over batch positives,
    #                                            h over history negatives)
    sum1 = (n_pos * s_hneg2
            + n_pos * n_hneg * g2
            + n_hneg * s_pos2
            + 2.0 * gamma * n_pos * s_hneg1
            - 2.0 * s_pos1 * s_hneg1
            - 2.0 * gamma * n_hneg * s_pos1)
    denom1 = n_pos * n_hneg
    loss_pos = jnp.where(denom1 > 0.0, sum1 / jnp.maximum(denom1, 1.0), 0.0)

    # loss_negative: mean over (hist_pos_i, neg_j) of (p_j + gamma - h_i)^2
    sum2 = (n_hpos * s_neg2
            + n_hpos * n_neg * g2
            + n_neg * s_hpos2
            + 2.0 * gamma * n_hpos * s_neg1
            - 2.0 * s_hpos1 * s_neg1
            - 2.0 * gamma * n_neg * s_hpos1)
    denom2 = n_neg * n_hpos
    loss_neg = jnp.where(denom2 > 0.0, sum2 / jnp.maximum(denom2, 1.0), 0.0)

    loss_ref[0, 0] = loss_pos + loss_neg


def rocstar_loss_pallas(y_pred_logits, y_true, hist_pred, hist_true, gamma):
    """y_pred_logits/y_true: (B,1) f32; hist_pred/hist_true: (S,1); gamma: scalar.

    Returns (loss_scalar, sigmoid_probs (B,1)) — probs reused for the rollover.
    """
    B = y_pred_logits.shape[0]
    S = hist_pred.shape[0]
    loss, probs = pl.pallas_call(
        _rocstar_kernel,
        out_shape=(
            jax.ShapeDtypeStruct((1, 1), jnp.float32),   # loss scalar
            jax.ShapeDtypeStruct((1, B), jnp.float32),   # sigmoid(y_pred)
        ),
        in_specs=[
            pl.BlockSpec(memory_space=pltpu.MemorySpace.SMEM),   # gamma (1,1)
            pl.BlockSpec(memory_space=pltpu.MemorySpace.VMEM),   # y_pred (1,B)
            pl.BlockSpec(memory_space=pltpu.MemorySpace.VMEM),   # y_true (1,B)
            pl.BlockSpec(memory_space=pltpu.MemorySpace.VMEM),   # hist_pred (1,S)
            pl.BlockSpec(memory_space=pltpu.MemorySpace.VMEM),   # hist_true (1,S)
        ],
        out_specs=(
            pl.BlockSpec(memory_space=pltpu.MemorySpace.SMEM),
            pl.BlockSpec(memory_space=pltpu.MemorySpace.VMEM),
        ),
    )(
        jnp.asarray(gamma, jnp.float32).reshape(1, 1),
        y_pred_logits.astype(jnp.float32).reshape(1, B),   # lane-dense batch
        y_true.astype(jnp.float32).reshape(1, B),
        hist_pred.astype(jnp.float32).reshape(1, S),        # lane-dense history
        hist_true.astype(jnp.float32).reshape(1, S),
    )
    return loss[0, 0], probs.reshape(B, 1)


# ----------------------------------------------------------------------------
# Glue (plain JAX): gamma update — requires sort + dynamic-size selection.
# TODO(synk): sort-based gamma selection kept in plain JAX (no Pallas sort).
# ----------------------------------------------------------------------------
def compute_gamma(hist_pred, hist_true, sample_size_gamma, delta):
    yp = hist_pred[-sample_size_gamma:].reshape(-1)
    yt = hist_true[-sample_size_gamma:].reshape(-1)
    pos_m = yt > 0
    neg_m = yt < 1
    diff = yp[:, None] - yp[None, :]                    # diff[i,j] = yp_i - yp_j
    pair_m = pos_m[:, None] & neg_m[None, :]            # (pos_i, neg_j) pairs
    n_pairs = jnp.sum(pair_m)
    correct_m = (diff > 0) & pair_m
    n_correct = jnp.sum(correct_m)
    auc = n_correct.astype(jnp.float32) / n_pairs.astype(jnp.float32)
    num_wrong = (1.0 - auc) * n_pairs.astype(jnp.float32)
    ordered = jnp.sort(jnp.where(correct_m, diff, jnp.inf).reshape(-1))
    idx = jnp.minimum((num_wrong * delta).astype(jnp.int32), n_correct - 1)
    return ordered[idx]


# Pure numpy reference mirroring the PyTorch forward (for verification).
def rocstar_loss_ref(y_pred_logits, y_true, hist_pred, hist_true, gamma):
    p = np.asarray(jax.nn.sigmoid(y_pred_logits)).reshape(-1)
    yt = np.asarray(y_true).reshape(-1)
    hp = np.asarray(hist_pred).reshape(-1)
    ht = np.asarray(hist_true).reshape(-1)
    g = float(gamma)
    positive = p[yt > 0]
    negative = p[yt < 1]
    pos_hist = hp[ht > 0]
    neg_hist = hp[ht < 1]
    lp = np.mean((neg_hist[None, :] + g - positive[:, None]) ** 2) if positive.size > 0 else 0.0
    ln = np.mean((negative[None, :] + g - pos_hist[:, None]) ** 2) if negative.size > 0 else 0.0
    return float(lp + ln)


if __name__ == "__main__":
    # Small, module-consistent shapes.
    B = 8
    sample_size = 128
    sample_size_gamma = 256
    delta = 2.0
    size = max(sample_size, sample_size_gamma)

    key = jax.random.PRNGKey(0)
    k1, k2, k3, k4 = jax.random.split(key, 4)
    # Deterministic stand-ins for the module's __init__ buffers.
    hist_pred = jax.random.uniform(k1, (size, 1), dtype=jnp.float32)
    hist_true = jax.random.randint(k2, (size, 1), 0, 2).astype(jnp.float32)
    # Guarantee both classes are present in the history window.
    hist_true = hist_true.at[0, 0].set(1.0).at[1, 0].set(0.0)
    # Current batch (logits) and hard {0,1} labels with both classes present.
    y_pred = jax.random.normal(k3, (B, 1), dtype=jnp.float32)
    y_true = jax.random.randint(k4, (B, 1), 0, 2).astype(jnp.float32)
    y_true = y_true.at[0, 0].set(1.0).at[1, 0].set(0.0)

    # steps == 0  ->  update_gamma() is triggered on the first call.
    gamma = compute_gamma(hist_pred, hist_true, sample_size_gamma, delta)

    hp_sample = hist_pred[-sample_size:]
    ht_sample = hist_true[-sample_size:]

    loss, probs = rocstar_loss_pallas(y_pred, y_true, hp_sample, ht_sample, gamma)
    loss, probs = jax.block_until_ready((loss, probs))

    # Stateful history rollover (functional): reuse in-kernel sigmoid output.
    new_hist_pred = jnp.concatenate([hist_pred[B:], probs], axis=0)
    new_hist_true = jnp.concatenate([hist_true[B:], y_true], axis=0)
    jax.block_until_ready((new_hist_pred, new_hist_true))

    # Verify against the brute-force pairwise reference.
    ref = rocstar_loss_ref(y_pred, y_true, hp_sample, ht_sample, gamma)
    assert np.isfinite(float(loss)), "loss not finite"
    assert abs(float(loss) - ref) < 1e-3 * max(1.0, abs(ref)), (float(loss), ref)
    # Probabilities returned by the kernel must match sigmoid of the logits.
    np.testing.assert_allclose(
        np.asarray(probs), np.asarray(jax.nn.sigmoid(y_pred)), rtol=1e-5, atol=1e-6
    )

    print("KERNEL_OK")
</pallas_src>

<mosaic_0001>
module attributes {stable_mosaic.version = 11 : i64} {
  func.func @_rocstar_kernel(%arg0: memref<1x1xf32, #tpu.memory_space<smem>>, %arg1: memref<1x8xf32, #tpu.memory_space<vmem>>, %arg2: memref<1x8xf32, #tpu.memory_space<vmem>>, %arg3: memref<1x128xf32, #tpu.memory_space<vmem>>, %arg4: memref<1x128xf32, #tpu.memory_space<vmem>>, %arg5: memref<1x1xf32, #tpu.memory_space<smem>>, %arg6: memref<1x8xf32, #tpu.memory_space<vmem>>) attributes {dimension_semantics = [], scalar_prefetch = 0 : i64, scratch_operands = 0 : i64, tpu.core_type = #tpu.core_type<tc>} {
    %c0 = arith.constant 0 : index
    %c0_0 = arith.constant 0 : index
    %0 = memref.load %arg0[%c0, %c0_0] : memref<1x1xf32, #tpu.memory_space<smem>>
    %c0_1 = arith.constant 0 : index
    %c0_2 = arith.constant 0 : index
    %1 = vector.load %arg1[%c0_1, %c0_2] : memref<1x8xf32, #tpu.memory_space<vmem>>, vector<1x8xf32>
    %cst = arith.constant 0.000000e+00 : f32
    %2 = vector.broadcast %cst : f32 to vector<1x8xf32>
    %3 = arith.subf %2, %1 : vector<1x8xf32>
    %4 = math.exp %3 : vector<1x8xf32>
    %cst_3 = arith.constant 1.000000e+00 : f32
    %5 = vector.broadcast %cst_3 : f32 to vector<1x8xf32>
    %6 = arith.addf %5, %4 : vector<1x8xf32>
    %7 = tpu.reciprocal %6 : vector<1x8xf32> -> vector<1x8xf32>
    %c0_4 = arith.constant 0 : index
    %c0_5 = arith.constant 0 : index
    %8 = vector.load %arg6[%c0_4, %c0_5] : memref<1x8xf32, #tpu.memory_space<vmem>>, vector<1x8xf32>
    tpu.vector_store %arg6[%c0_4, %c0_5], %7 {strides = array<i32>} : memref<1x8xf32, #tpu.memory_space<vmem>>, vector<1x8xf32>,
    %c0_6 = arith.constant 0 : index
    %c0_7 = arith.constant 0 : index
    %9 = vector.load %arg2[%c0_6, %c0_7] : memref<1x8xf32, #tpu.memory_space<vmem>>, vector<1x8xf32>
    %cst_8 = arith.constant 0.000000e+00 : f32
    %10 = vector.broadcast %cst_8 : f32 to vector<1x8xf32>
    %11 = arith.cmpf ogt, %9, %10 : vector<1x8xf32>
    %12 = arith.extui %11 : vector<1x8xi1> to vector<1x8xi32>
    %13 = arith.sitofp %12 : vector<1x8xi32> to vector<1x8xf32>
    %cst_9 = arith.constant 1.000000e+00 : f32
    %14 = vector.broadcast %cst_9 : f32 to vector<1x8xf32>
    %15 = arith.cmpf olt, %9, %14 : vector<1x8xf32>
    %16 = arith.extui %15 : vector<1x8xi1> to vector<1x8xi32>
    %17 = arith.sitofp %16 : vector<1x8xi32> to vector<1x8xf32>
    %c0_10 = arith.constant 0 : index
    %c0_11 = arith.constant 0 : index
    %18 = vector.load %arg3[%c0_10, %c0_11] : memref<1x128xf32, #tpu.memory_space<vmem>>, vector<1x128xf32>
    %c0_12 = arith.constant 0 : index
    %c0_13 = arith.constant 0 : index
    %19 = vector.load %arg4[%c0_12, %c0_13] : memref<1x128xf32, #tpu.memory_space<vmem>>, vector<1x128xf32>
    %cst_14 = arith.constant 0.000000e+00 : f32
    %20 = vector.broadcast %cst_14 : f32 to vector<1x128xf32>
    %21 = arith.cmpf ogt, %19, %20 : vector<1x128xf32>
    %22 = arith.extui %21 : vector<1x128xi1> to vector<1x128xi32>
    %23 = arith.sitofp %22 : vector<1x128xi32> to vector<1x128xf32>
    %cst_15 = arith.constant 1.000000e+00 : f32
    %24 = vector.broadcast %cst_15 : f32 to vector<1x128xf32>
    %25 = arith.cmpf olt, %19, %24 : vector<1x128xf32>
    %26 = arith.extui %25 : vector<1x128xi1> to vector<1x128xi32>
    %27 = arith.sitofp %26 : vector<1x128xi32> to vector<1x128xf32>
    %28 = arith.mulf %7, %7 : vector<1x8xf32>
    %29 = arith.mulf %18, %18 : vector<1x128xf32>
    %30 = vector.shape_cast %13 : vector<1x8xf32> to vector<1x1x8xf32>
    %cst_16 = arith.constant dense<0.000000e+00> : vector<1xf32>
    %31 = vector.multi_reduction <add>, %30, %cst_16 [1, 2] : vector<1x1x8xf32> to vector<1xf32>
    %32 = vector.shape_cast %31 : vector<1xf32> to vector<1x1x1xf32>
    %33 = vector.extract %32[0, 0, 0] : f32 from vector<1x1x1xf32>
    %34 = arith.mulf %13, %7 : vector<1x8xf32>
    %35 = vector.shape_cast %34 : vector<1x8xf32> to vector<1x1x8xf32>
    %cst_17 = arith.constant dense<0.000000e+00> : vector<1xf32>
    %36 = vector.multi_reduction <add>, %35, %cst_17 [1, 2] : vector<1x1x8xf32> to vector<1xf32>
    %37 = vector.shape_cast %36 : vector<1xf32> to vector<1x1x1xf32>
    %38 = vector.extract %37[0, 0, 0] : f32 from vector<1x1x1xf32>
    %39 = arith.mulf %13, %28 : vector<1x8xf32>
    %40 = vector.shape_cast %39 : vector<1x8xf32> to vector<1x1x8xf32>
    %cst_18 = arith.constant dense<0.000000e+00> : vector<1xf32>
    %41 = vector.multi_reduction <add>, %40, %cst_18 [1, 2] : vector<1x1x8xf32> to vector<1xf32>
    %42 = vector.shape_cast %41 : vector<1xf32> to vector<1x1x1xf32>
    %43 = vector.extract %42[0, 0, 0] : f32 from vector<1x1x1xf32>
    %44 = vector.shape_cast %17 : vector<1x8xf32> to vector<1x1x8xf32>
    %cst_19 = arith.constant dense<0.000000e+00> : vector<1xf32>
    %45 = vector.multi_reduction <add>, %44, %cst_19 [1, 2] : vector<1x1x8xf32> to vector<1xf32>
    %46 = vector.shape_cast %45 : vector<1xf32> to vector<1x1x1xf32>
    %47 = vector.extract %46[0, 0, 0] : f32 from vector<1x1x1xf32>
    %48 = arith.mulf %17, %7 : vector<1x8xf32>
    %49 = vector.shape_cast %48 : vector<1x8xf32> to vector<1x1x8xf32>
    %cst_20 = arith.constant dense<0.000000e+00> : vector<1xf32>
    %50 = vector.multi_reduction <add>, %49, %cst_20 [1, 2] : vector<1x1x8xf32> to vector<1xf32>
    %51 = vector.shape_cast %50 : vector<1xf32> to vector<1x1x1xf32>
    %52 = vector.extract %51[0, 0, 0] : f32 from vector<1x1x1xf32>
    %53 = arith.mulf %17, %28 : vector<1x8xf32>
    %54 = vector.shape_cast %53 : vector<1x8xf32> to vector<1x1x8xf32>
    %cst_21 = arith.constant dense<0.000000e+00> : vector<1xf32>
    %55 = vector.multi_reduction <add>, %54, %cst_21 [1, 2] : vector<1x1x8xf32> to vector<1xf32>
    %56 = vector.shape_cast %55 : vector<1xf32> to vector<1x1x1xf32>
    %57 = vector.extract %56[0, 0, 0] : f32 from vector<1x1x1xf32>
    %58 = vector.shape_cast %23 : vector<1x128xf32> to vector<1x1x128xf32>
    %cst_22 = arith.constant dense<0.000000e+00> : vector<1xf32>
    %59 = vector.multi_reduction <add>, %58, %cst_22 [1, 2] : vector<1x1x128xf32> to vector<1xf32>
    %60 = vector.shape_cast %59 : vector<1xf32> to vector<1x1x1xf32>
    %61 = vector.extract %60[0, 0, 0] : f32 from vector<1x1x1xf32>
    %62 = arith.mulf %23, %18 : vector<1x128xf32>
    %63 = vector.shape_cast %62 : vector<1x128xf32> to vector<1x1x128xf32>
    %cst_23 = arith.constant dense<0.000000e+00> : vector<1xf32>
    %64 = vector.multi_reduction <add>, %63, %cst_23 [1, 2] : vector<1x1x128xf32> to vector<1xf32>
    %65 = vector.shape_cast %64 : vector<1xf32> to vector<1x1x1xf32>
    %66 = vector.extract %65[0, 0, 0] : f32 from vector<1x1x1xf32>
    %67 = arith.mulf %23, %29 : vector<1x128xf32>
    %68 = vector.shape_cast %67 : vector<1x128xf32> to vector<1x1x128xf32>
    %cst_24 = arith.constant dense<0.000000e+00> : vector<1xf32>
    %69 = vector.multi_reduction <add>, %68, %cst_24 [1, 2] : vector<1x1x128xf32> to vector<1xf32>
    %70 = vector.shape_cast %69 : vector<1xf32> to vector<1x1x1xf32>
    %71 = vector.extract %70[0, 0, 0] : f32 from vector<1x1x1xf32>
    %72 = vector.shape_cast %27 : vector<1x128xf32> to vector<1x1x128xf32>
    %cst_25 = arith.constant dense<0.000000e+00> : vector<1xf32>
    %73 = vector.multi_reduction <add>, %72, %cst_25 [1, 2] : vector<1x1x128xf32> to vector<1xf32>
    %74 = vector.shape_cast %73 : vector<1xf32> to vector<1x1x1xf32>
    %75 = vector.extract %74[0, 0, 0] : f32 from vector<1x1x1xf32>
    %76 = arith.mulf %27, %18 : vector<1x128xf32>
    %77 = vector.shape_cast %76 : vector<1x128xf32> to vector<1x1x128xf32>
    %cst_26 = arith.constant dense<0.000000e+00> : vector<1xf32>
    %78 = vector.multi_reduction <add>, %77, %cst_26 [1, 2] : vector<1x1x128xf32> to vector<1xf32>
    %79 = vector.shape_cast %78 : vector<1xf32> to vector<1x1x1xf32>
    %80 = vector.extract %79[0, 0, 0] : f32 from vector<1x1x1xf32>
    %81 = arith.mulf %27, %29 : vector<1x128xf32>
    %82 = vector.shape_cast %81 : vector<1x128xf32> to vector<1x1x128xf32>
    %cst_27 = arith.constant dense<0.000000e+00> : vector<1xf32>
    %83 = vector.multi_reduction <add>, %82, %cst_27 [1, 2] : vector<1x1x128xf32> to vector<1xf32>
    %84 = vector.shape_cast %83 : vector<1xf32> to vector<1x1x1xf32>
    %85 = vector.extract %84[0, 0, 0] : f32 from vector<1x1x1xf32>
    %86 = arith.mulf %0, %0 : f32
    %87 = arith.mulf %33, %85 : f32
    %88 = arith.mulf %33, %75 : f32
    %89 = arith.mulf %88, %86 : f32
    %90 = arith.addf %87, %89 : f32
    %91 = arith.mulf %75, %43 : f32
    %92 = arith.addf %90, %91 : f32
    %cst_28 = arith.constant 2.000000e+00 : f32
    %93 = arith.mulf %cst_28, %0 : f32
    %94 = arith.mulf %93, %33 : f32
    %95 = arith.mulf %94, %80 : f32
    %96 = arith.addf %92, %95 : f32
    %cst_29 = arith.constant 2.000000e+00 : f32
    %97 = arith.mulf %cst_29, %38 : f32
    %98 = arith.mulf %97, %80 : f32
    %99 = arith.subf %96, %98 : f32
    %cst_30 = arith.constant 2.000000e+00 : f32
    %100 = arith.mulf %cst_30, %0 : f32
    %101 = arith.mulf %100, %75 : f32
    %102 = arith.mulf %101, %38 : f32
    %103 = arith.subf %99, %102 : f32
    %104 = arith.mulf %33, %75 : f32
    %cst_31 = arith.constant 0.000000e+00 : f32
    %105 = arith.cmpf ogt, %104, %cst_31 : f32
    %cst_32 = arith.constant 1.000000e+00 : f32
    %106 = arith.maximumf %104, %cst_32 : f32
    %107 = arith.divf %103, %106 : f32
    %cst_33 = arith.constant 0.000000e+00 : f32
    %108 = arith.select %105, %107, %cst_33 : f32
    %109 = arith.mulf %61, %57 : f32
    %110 = arith.mulf %61, %47 : f32
    %111 = arith.mulf %110, %86 : f32
    %112 = arith.addf %109, %111 : f32
    %113 = arith.mulf %47, %71 : f32
    %114 = arith.addf %112, %113 : f32
    %cst_34 = arith.constant 2.000000e+00 : f32
    %115 = arith.mulf %cst_34, %0 : f32
    %116 = arith.mulf %115, %61 : f32
    %117 = arith.mulf %116, %52 : f32
    %118 = arith.addf %114, %117 : f32
    %cst_35 = arith.constant 2.000000e+00 : f32
    %119 = arith.mulf %cst_35, %66 : f32
    %120 = arith.mulf %119, %52 : f32
    %121 = arith.subf %118, %120 : f32
    %cst_36 = arith.constant 2.000000e+00 : f32
    %122 = arith.mulf %cst_36, %0 : f32
    %123 = arith.mulf %122, %47 : f32
    %124 = arith.mulf %123, %66 : f32
    %125 = arith.subf %121, %124 : f32
    %126 = arith.mulf %47, %61 : f32
    %cst_37 = arith.constant 0.000000e+00 : f32
    %127 = arith.cmpf ogt, %126, %cst_37 : f32
    %cst_38 = arith.constant 1.000000e+00 : f32
    %128 = arith.maximumf %126, %cst_38 : f32
    %129 = arith.divf %125, %128 : f32
    %cst_39 = arith.constant 0.000000e+00 : f32
    %130 = arith.select %127, %129, %cst_39 : f32
    %131 = arith.addf %108, %130 : f32
    %c0_40 = arith.constant 0 : index
    %c0_41 = arith.constant 0 : index
    %132 = memref.load %arg5[%c0_40, %c0_41] : memref<1x1xf32, #tpu.memory_space<smem>>
    memref.store %131, %arg5[%c0_40, %c0_41] : memref<1x1xf32, #tpu.memory_space<smem>>
    return
  }
}

</mosaic_0001>

<llo_original>
// kernel: tpu_custom_call.1
$region0: #{tpu_custom_call.1}
  #allocation0 [shape = 'u32[]', space=smem, size = 0x4, offset = 0x4, fixed_abs, tag = 'smem constant byte address 0x4 - core index']
  #allocation1 [shape = 'u32[144,128]{1,0:T(1,128)}', space=vmem, size = 0x12000, scoped, tag = 'internal scratch']
  #allocation2 [shape = 'f32[1,1]{1,0:T(1,128)S(6)}', space=smem, size = 0x200, scoped, tag = 'scoped memory for tpu_custom_call.1']
  %s0 = inlined_call_operand.<no memory space> [shape: f32[1,1], index: 0, kind: input, shape index: {}]
  %s1 = inlined_call_operand.vmem [shape: f32[1,8], index: 1, kind: input, shape index: {}]
  %s2 = inlined_call_operand.vmem [shape: f32[1,8], index: 2, kind: input, shape index: {}]
  %s3 = inlined_call_operand.vmem [shape: f32[1,128], index: 3, kind: input, shape index: {}]
  %s4 = inlined_call_operand.vmem [shape: f32[1,128], index: 4, kind: input, shape index: {}]
  %s5 = inlined_call_operand.hbm [shape: f32[1,1], index: 5, kind: output, shape index: {0}]
  %s6 = inlined_call_operand.hbm [shape: f32[1,8], index: 6, kind: output, shape index: {1}]
  %7 = xla_tuple %s5, %s6
  %s8 = sld [smem:[#allocation0]]
  $region38: #{tpu_custom_call.1} parent=0
    _
  %s10 = ssub.s32 1, %s8
  %s11 = scalar_select 0, %s10, %s8
  %12 = sst [smem:[#allocation2]] %s0
  $region1: #{tpu_custom_call.1} parent=0
    #allocation3 [shape = 'u8[512]{0}', space=smem, size = 0x200, scoped, tag = 'output window, operand 0, single buffered']
    #allocation4 [shape = 's32[1]{0}', space=sflag, size = 0x4, scoped, tag = 'scoped memory for tpu_custom_call.1']
    #allocation5 [shape = 's32[1]{0}', space=sflag, size = 0x4, scoped, tag = 'scoped memory for tpu_custom_call.1']
    #allocation6 [shape = 'u8[512]{0}', space=vmem, size = 0x400, scoped, tag = 'output window, operand 1, single buffered']
    %13 = vsyncpa [#allocation5], 0
    %14 = vsyncpa [#allocation4], 0
    // Predicated region
    $region2: #{tpu_custom_call.1} parent=1 // pred_check
      _
    $region3: #{tpu_custom_call.1} parent=1 // pred_check_branch
      %16 = sbr.rel (0) target = $region5
    $region4: #{tpu_custom_call.1} parent=1 // pred_region
      _
    $region5: #{tpu_custom_call.1} parent=1 // pred_fallthru
      _
    // Predicated region
    $region6: #{tpu_custom_call.1} parent=1 // pred_check
      _
    $region7: #{tpu_custom_call.1} parent=1 // pred_check_branch
      %18 = sbr.rel (0) target = $region9
    $region8: #{tpu_custom_call.1} parent=1 // pred_region
      _
    $region9: #{tpu_custom_call.1} parent=1 // pred_fallthru
      _
    // Predicated region
    $region10: #{tpu_custom_call.1} parent=1 // pred_check
      _
    $region11: #{tpu_custom_call.1} parent=1 // pred_check_branch
      %20 = sbr.rel (0) target = $region13
    $region12: #{tpu_custom_call.1} parent=1 // pred_region
      _
    $region13: #{tpu_custom_call.1} parent=1 // pred_fallthru
      _
    // Predicated region
    $region14: #{tpu_custom_call.1} parent=1 // pred_check
      _
    $region15: #{tpu_custom_call.1} parent=1 // pred_check_branch
      %22 = sbr.rel (0) target = $region17
    $region16: #{tpu_custom_call.1} parent=1 // pred_region
      _
    $region17: #{tpu_custom_call.1} parent=1 // pred_fallthru
      _
    // Predicated region
    $region18: #{tpu_custom_call.1} parent=1 // pred_check
      _
    $region19: #{tpu_custom_call.1} parent=1 // pred_check_branch
      %24 = sbr.rel (0) target = $region21
    $region20: #{tpu_custom_call.1} parent=1 // pred_region
      _
    $region21: #{tpu_custom_call.1} parent=1 // pred_fallthru
      _
    %s25 = sld [smem:[#allocation2]]
    %v26 = vld [vmem:[%s1] sm:$0x1]
    %v27 = vsub.f32 0.0, %v26
    %v28 = vmul.f32 %v27, 1.442695
    %v29 = vpow.pop %v28
    %v30 = vadd.f32 %v29, 1.0
    %v31 = vrcp.pop %v30
    %vm32 = vcmask 57344
    %33 = vst.msk [vmem:[#allocation6] sm:$0x1] %vm32, %v31
    %v34 = vld [vmem:[%s2] sm:$0x1]
    %vm35 = vcmp.gt.f32.partialorder %v34, 0.0
    %v36 = vsel %vm35, 1, 0
    %v37 = vcvt.s32.f32 %v36
    %vm38 = vcmp.lt.f32.partialorder %v34, 1.0
    %v39 = vsel %vm38, 1, 0
    %v40 = vcvt.s32.f32 %v39
    %v41 = vld [vmem:[%s3] sm:$0x1]
    %v42 = vld [vmem:[%s4] sm:$0x1]
    %vm43 = vcmp.gt.f32.partialorder %v42, 0.0
    %v44 = vsel %vm43, 1, 0
    %v45 = vcvt.s32.f32 %v44
    %vm46 = vcmp.lt.f32.partialorder %v42, 1.0
    %v47 = vsel %vm46, 1, 0
    %v48 = vcvt.s32.f32 %v47
    %v49 = vmul.f32 %v31, %v31
    %v50 = vmul.f32 %v41, %v41
    %v51 = vsel %vm32, %v37, 0.0
    %52 = vadd.xlane.f32.xlu0 %v51
    %v53 = vpop.xlane.xlu0 %52
    %v54 = vrot.slane %v53, 4
    %v55 = vadd.f32 %v53, %v54
    %v56 = vrot.slane %v55, 2
    %v57 = vadd.f32 %v55, %v56
    %v58 = vrot.slane %v57, 1
    %v59 = vadd.f32 %v57, %v58
    %s60 = vtos %v59
    %v61 = vmul.f32 %v37, %v31
    %v62 = vsel %vm32, %v61, 0.0
    %63 = vadd.xlane.f32.xlu0 %v62
    %v64 = vpop.xlane.xlu0 %63
    %v65 = vrot.slane %v64, 4
    %v66 = vadd.f32 %v64, %v65
    %v67 = vrot.slane %v66, 2
    %v68 = vadd.f32 %v66, %v67
    %v69 = vrot.slane %v68, 1
    %v70 = vadd.f32 %v68, %v69
    %s71 = vtos %v70
    %v72 = vmul.f32 %v37, %v49
    %v73 = vsel %vm32, %v72, 0.0
    %74 = vadd.xlane.f32.xlu0 %v73
    %v75 = vpop.xlane.xlu0 %74
    %v76 = vrot.slane %v75, 4
    %v77 = vadd.f32 %v75, %v76
    %v78 = vrot.slane %v77, 2
    %v79 = vadd.f32 %v77, %v78
    %v80 = vrot.slane %v79, 1
    %v81 = vadd.f32 %v79, %v80
    %s82 = vtos %v81
    %v83 = vsel %vm32, %v40, 0.0
    %84 = vadd.xlane.f32.xlu0 %v83
    %v85 = vpop.xlane.xlu0 %84
    %v86 = vrot.slane %v85, 4
    %v87 = vadd.f32 %v85, %v86
    %v88 = vrot.slane %v87, 2
    %v89 = vadd.f32 %v87, %v88
    %v90 = vrot.slane %v89, 1
    %v91 = vadd.f32 %v89, %v90
    %s92 = vtos %v91
    %v93 = vmul.f32 %v40, %v31
    %v94 = vsel %vm32, %v93, 0.0
    %95 = vadd.xlane.f32.xlu0 %v94
    %v96 = vpop.xlane.xlu0 %95
    %v97 = vrot.slane %v96, 4
    %v98 = vadd.f32 %v96, %v97
    %v99 = vrot.slane %v98, 2
    %v100 = vadd.f32 %v98, %v99
    %v101 = vrot.slane %v100, 1
    %v102 = vadd.f32 %v100, %v101
    %s103 = vtos %v102
    %v104 = vmul.f32 %v40, %v49
    %v105 = vsel %vm32, %v104, 0.0
    %106 = vadd.xlane.f32.xlu0 %v105
    %v107 = vpop.xlane.xlu0 %106
    %v108 = vrot.slane %v107, 4
    %v109 = vadd.f32 %v107, %v108
    %v110 = vrot.slane %v109, 2
    %v111 = vadd.f32 %v109, %v110
    %v112 = vrot.slane %v111, 1
    %v113 = vadd.f32 %v111, %v112
    %s114 = vtos %v113
    %vm115 = vcmask 1040384
    %v116 = vsel %vm115, %v45, 0.0
    %117 = vadd.xlane.f32.xlu0 %v116
    %v118 = vpop.xlane.xlu0 %117
    %v119 = vrot.slane %v118, 4
    %v120 = vadd.f32 %v118, %v119
    %v121 = vrot.slane %v120, 2
    %v122 = vadd.f32 %v120, %v121
    %v123 = vrot.slane %v122, 1
    %v124 = vadd.f32 %v122, %v123
    %s125 = vtos %v124
    %v126 = vmul.f32 %v45, %v41
    %v127 = vsel %vm115, %v126, 0.0
    %128 = vadd.xlane.f32.xlu0 %v127
    %v129 = vpop.xlane.xlu0 %128
    %v130 = vrot.slane %v129, 4
    %v131 = vadd.f32 %v129, %v130
    %v132 = vrot.slane %v131, 2
    %v133 = vadd.f32 %v131, %v132
    %v134 = vrot.slane %v133, 1
    %v135 = vadd.f32 %v133, %v134
    %s136 = vtos %v135
    %v137 = vmul.f32 %v45, %v50
    %v138 = vsel %vm115, %v137, 0.0
    %139 = vadd.xlane.f32.xlu0 %v138
    %v140 = vpop.xlane.xlu0 %139
    %v141 = vrot.slane %v140, 4
    %v142 = vadd.f32 %v140, %v141
    %v143 = vrot.slane %v142, 2
    %v144 = vadd.f32 %v142, %v143
    %v145 = vrot.slane %v144, 1
    %v146 = vadd.f32 %v144, %v145
    %s147 = vtos %v146
    %v148 = vsel %vm115, %v48, 0.0
    %149 = vadd.xlane.f32.xlu0 %v148
    %v150 = vpop.xlane.xlu0 %149
    %v151 = vrot.slane %v150, 4
    %v152 = vadd.f32 %v150, %v151
    %v153 = vrot.slane %v152, 2
    %v154 = vadd.f32 %v152, %v153
    %v155 = vrot.slane %v154, 1
    %v156 = vadd.f32 %v154, %v155
    %s157 = vtos %v156
    %v158 = vmul.f32 %v48, %v41
    %v159 = vsel %vm115, %v158, 0.0
    %160 = vadd.xlane.f32.xlu0 %v159
    %v161 = vpop.xlane.xlu0 %160
    %v162 = vrot.slane %v161, 4
    %v163 = vadd.f32 %v161, %v162
    %v164 = vrot.slane %v163, 2
    %v165 = vadd.f32 %v163, %v164
    %v166 = vrot.slane %v165, 1
    %v167 = vadd.f32 %v165, %v166
    %s168 = vtos %v167
    %v169 = vmul.f32 %v48, %v50
    %v170 = vsel %vm115, %v169, 0.0
    %171 = vadd.xlane.f32.xlu0 %v170
    %v172 = vpop.xlane.xlu0 %171
    %v173 = vrot.slane %v172, 4
    %v174 = vadd.f32 %v172, %v173
    %v175 = vrot.slane %v174, 2
    %v176 = vadd.f32 %v174, %v175
    %v177 = vrot.slane %v176, 1
    %v178 = vadd.f32 %v176, %v177
    %s179 = vtos %v178
    %s180 = smul.f32 %s25, %s25
    %s181 = smul.f32 %s60, %s179
    %s182 = smul.f32 %s60, %s157
    %s183 = smul.f32 %s182, %s180
    %s184 = sadd.f32 %s181, %s183
    %s185 = smul.f32 %s157, %s82
    %s186 = sadd.f32 %s184, %s185
    %s187 = smul.f32 %s25, 2.0
    %s188 = smul.f32 %s187, %s60
    %s189 = smul.f32 %s188, %s168
    %s190 = sadd.f32 %s186, %s189
    %s191 = smul.f32 %s71, 2.0
    %s192 = smul.f32 %s191, %s168
    %s193 = ssub.f32 %s190, %s192
    %s194 = smul.f32 %s187, %s157
    %s195 = smul.f32 %s194, %s71
    %s196 = ssub.f32 %s193, %s195
    %p197 = scmp.gt.f32.partialorder %s182, 0.0
    %s198 = smax.f32 %s182, 1.0
    %v199 = vstv %s198
    %v200 = vrcp.pop %v199
    %s201 = vtos %v200
    %s202 = smul.f32 %s196, %s201
    %s203 = scalar_select %p197, %s202, 0.0
    %s204 = smul.f32 %s125, %s114
    %s205 = smul.f32 %s125, %s92
    %s206 = smul.f32 %s205, %s180
    %s207 = sadd.f32 %s204, %s206
    %s208 = smul.f32 %s92, %s147
    %s209 = sadd.f32 %s207, %s208
    %s210 = smul.f32 %s187, %s125
    %s211 = smul.f32 %s210, %s103
    %s212 = sadd.f32 %s209, %s211
    %s213 = smul.f32 %s136, 2.0
    %s214 = smul.f32 %s213, %s103
    %s215 = ssub.f32 %s212, %s214
    %s216 = smul.f32 %s187, %s92
    %s217 = smul.f32 %s216, %s136
    %s218 = ssub.f32 %s215, %s217
    %p219 = scmp.gt.f32.partialorder %s205, 0.0
    %s220 = smax.f32 %s205, 1.0
    %v221 = vstv %s220
    %v222 = vrcp.pop %v221
    %s223 = vtos %v222
    %s224 = smul.f32 %s218, %s223
    %s225 = scalar_select %p219, %s224, 0.0
    %s226 = sadd.f32 %s203, %s225
    %s227 = scalar_lea.smem [#allocation3], 0
    %228 = sst [smem:[%s227]] %s226
    // Predicated region
    $region22: #{tpu_custom_call.1} parent=1 // pred_check
      _
    $region23: #{tpu_custom_call.1} parent=1 // pred_check_branch
      %230 = sbr.rel (0) target = $region25
    $region24: #{tpu_custom_call.1} parent=1 // pred_region
      %s232 = ssub.s32 16, 16
      %233 = vsyncadd [#allocation5], %s232
      %236 = dma.smem_to_hbm [#allocation3], 16, %s5, [#allocation5]
    $region25: #{tpu_custom_call.1} parent=1 // pred_fallthru
      _
    // Predicated region
    $region26: #{tpu_custom_call.1} parent=1 // pred_check
      _
    $region27: #{tpu_custom_call.1} parent=1 // pred_check_branch
      %238 = sbr.rel (0) target = $region29
    $region28: #{tpu_custom_call.1} parent=1 // pred_region
      %s240 = ssub.s32 16, 16
      %241 = vsyncadd [#allocation4], %s240
      %s243 = sshll.u32 [#allocation6], 4
      %s244 = int_to_ptr.vmem [resolvable:$true] %s243
      %246 = dma.vmem_to_hbm [thread:$0]  %s244, 16, %s6, [#allocation4]
    $region29: #{tpu_custom_call.1} parent=1 // pred_fallthru
      _
    // Predicated region
    $region30: #{tpu_custom_call.1} parent=1 // pred_check
      _
    $region31: #{tpu_custom_call.1} parent=1 // pred_check_branch
      %248 = sbr.rel (0) target = $region33
    $region32: #{tpu_custom_call.1} parent=1 // pred_region
      %249 = dma.done [#allocation5], 16
    $region33: #{tpu_custom_call.1} parent=1 // pred_fallthru
      _
    // Predicated region
    $region34: #{tpu_custom_call.1} parent=1 // pred_check
      _
    $region35: #{tpu_custom_call.1} parent=1 // pred_check_branch
      %251 = sbr.rel (0) target = $region37
    $region36: #{tpu_custom_call.1} parent=1 // pred_region
      %252 = dma.done [#allocation4], 16
    $region37: #{tpu_custom_call.1} parent=1 // pred_fallthru
      _
    %253 = sfence
    %254 = vsyncpa [#allocation4], 1
    %255 = vsyncpa [#allocation5], 1

</llo_original>
